<compile_context>
chip_gen: v7x
topology: tpu7x:2x2x1
jax: 0.10.0
libtpu: 0.0.40
codegen_flags: <defaults>
</compile_context>

<pallas_src>
import functools

import jax
import jax.numpy as jnp
from jax import lax
from jax.experimental import pallas as pl
from jax.experimental.pallas import tpu as pltpu

_BN_EPS = 1e-5
_INV_SQRT2 = 0.7071067811865476

# Abramowitz & Stegun 7.1.26 erf coefficients (max abs error 1.5e-7).
_AS_P = 0.3275911
_AS_A1 = 0.254829592
_AS_A2 = -0.284496736
_AS_A3 = 1.421413741
_AS_A4 = -1.453152027
_AS_A5 = 1.061405429


def _gelu_exact(z):
    """Exact (erf) GELU; erf via A&S 7.1.26 so the transcendental is an EUP exp."""
    az = jnp.abs(z)
    a = az * _INV_SQRT2
    t = 1.0 / (1.0 + _AS_P * a)
    poly = t * (_AS_A1 + t * (_AS_A2 + t * (_AS_A3 + t * (_AS_A4 + t * _AS_A5))))
    erf_abs = 1.0 - poly * jnp.exp(-(a * a))        # erf(|z|/sqrt(2)), err<1.5e-7
    # z * erf(z/sqrt(2)) == |z| * erf(|z|/sqrt(2))  (erf is odd) -> no sign select.
    return 0.5 * (z + az * erf_abs)


def _band_kernel(x_ref, taps_ref, bias_ref, gamma_ref, beta_ref, o_ref, *, h, w):
    # x_ref:     (b, cb, hw)   one band-group (g squeezed), cb rows, hw = h*w
    # taps_ref:  (9, cb, 1)    depthwise taps, row k = ky*3 + kx
    # bias_ref:  (cb, 1)       conv bias
    # gamma_ref: (cb, 1)       BatchNorm weight
    # beta_ref:  (cb, 1)       BatchNorm bias
    # o_ref:     (b, cb, hw)
    b, cb, hw = x_ref.shape

    x = x_ref[...].astype(jnp.float32)

    # Boundary masks, built in-kernel (no HBM traffic).  pos is the flat h*w
    # index along lanes; col is the w (column) index.
    pos = lax.broadcasted_iota(jnp.int32, (1, 1, hw), 2)
    if w & (w - 1) == 0:
        col = jnp.bitwise_and(pos, w - 1)
    else:
        col = pos % w
    m_l = (col >= 1).astype(jnp.float32)             # dx = -1 valid
    m_r = (col <= w - 2).astype(jnp.float32)         # dx = +1 valid
    m_u = (pos >= w).astype(jnp.float32)             # dy = -1 valid
    m_d = (pos < (h - 1) * w).astype(jnp.float32)    # dy = +1 valid
    masks = {
        (-1, -1): m_u * m_l, (-1, 0): m_u, (-1, 1): m_u * m_r,
        (0, -1): m_l,                      (0, 1): m_r,
        (1, -1): m_d * m_l,  (1, 0): m_d,  (1, 1): m_d * m_r,
    }

    # Depthwise 3x3 conv:  out[f] += x[f + dy*w + dx] * tap[dy, dx]
    # Each off-center tap is a static rotation of the flat rows (XLU) with the
    # wrapped lanes masked off; contributions accumulate sequentially.
    acc = x * taps_ref[4][None]                       # center tap, no mask
    for dy in (-1, 0, 1):
        for dx in (-1, 0, 1):
            if dy == 0 and dx == 0:
                continue
            s = dy * w + dx
            win = pltpu.roll(x, (-s) % hw, axis=2)    # win[f] = x[(f + s) mod hw]
            tap = taps_ref[(dy + 1) * 3 + (dx + 1)][None]   # (1, cb, 1)
            acc = acc + (win * masks[(dy, dx)]) * tap
    z = acc + bias_ref[...][None]                     # (b, cb, hw)

    # Exact GELU (erf formulation, as in PyTorch nn.GELU default).
    y = _gelu_exact(z)

    # One-pass BatchNorm2d, training-mode semantics: biased batch statistics
    # over (b, h, w), computed independently per band and per channel.
    inv_n = 1.0 / (b * hw)
    s1 = jnp.sum(y, axis=(0, 2), keepdims=True)       # (1, cb, 1)
    s2 = jnp.sum(y * y, axis=(0, 2), keepdims=True)
    mean = s1 * inv_n
    var = jnp.maximum(s2 * inv_n - mean * mean, 0.0)
    scale = gamma_ref[...][None] * lax.rsqrt(var + _BN_EPS)
    shift = beta_ref[...][None] - mean * scale
    o_ref[...] = (y * scale + shift).astype(o_ref.dtype)


def _vmem_capacity():
    try:
        return int(pltpu.get_tpu_info().vmem_capacity_bytes)
    except Exception:                                 # fall back to v7x-sized part
        return 64 * 1024 * 1024


def _band_group(g, c):
    """Whole bands folded into the channel/sublane axis (free reshape) so the
    second-minor block dim reaches a multiple of 8 sublanes."""
    if c % 8 == 0:
        return 1
    for d in range(2, g + 1):
        if g % d == 0 and (c * d) % 8 == 0:
            return d
    return 1


def _choose_c_block(b, g2, c2, hw, vmem_cap):
    # Per-block f32 bytes; ~8x live copies once in/out double-buffering and
    # elementwise temporaries are counted -> target ~vmem_cap/16 per block.
    budget = max(vmem_cap // 16, 1 << 20)
    blk_bytes = lambda cb: b * cb * hw * 4
    if c2 % 8 != 0:
        # Can't split: second-minor block dim must be a multiple of 8 sublanes
        # (or the full dim).
        # TODO(synk): very large b*h*w with awkward c needs an h-tile axis with
        # accumulate-then-finalize BatchNorm statistics (and 16-row tiles for
        # bf16 inputs).
        return c2
    cands = [cb for cb in range(c2, 7, -8) if c2 % cb == 0]   # descending
    cb = c2
    for cand in cands:
        cb = cand
        if blk_bytes(cand) <= budget:
            break
    # v7x-class parts (<= ~64 MiB VMEM) have two TensorCores: prefer an even,
    # >= 4-step parallel grid when a legal further split exists.
    if vmem_cap <= 80 * 1024 * 1024:
        for cand in cands:
            steps = g2 * (c2 // cand)
            if cand <= cb and steps >= 4 and steps % 2 == 0:
                cb = cand
                break
    return cb


def band_wise_conv(x, weight, bias, gamma, beta):
    """x: (b, g, c, h, w) f32.  weight: (c, 1, 3, 3).  bias/gamma/beta: (c,)."""
    b, g, c, h, w = x.shape
    hw = h * w

    # Fold whole bands into the channel axis when that fills the 8 sublanes
    # (contiguous reshape, so it is free).  Statistics/taps stay per
    # (band, channel) row, so the kernel is unchanged.
    d = _band_group(g, c)
    g2, c2 = g // d, c * d
    x_flat = x.reshape(b, g2, c2, hw)     # trailing axis lane-dense (h*w)

    taps = jnp.transpose(weight.reshape(c, 9), (1, 0)).reshape(9, c, 1)
    taps = taps.astype(jnp.float32)
    bias_r = bias.reshape(c, 1).astype(jnp.float32)
    gamma_r = gamma.reshape(c, 1).astype(jnp.float32)
    beta_r = beta.reshape(c, 1).astype(jnp.float32)
    if d > 1:
        taps = jnp.tile(taps, (1, d, 1))
        bias_r = jnp.tile(bias_r, (d, 1))
        gamma_r = jnp.tile(gamma_r, (d, 1))
        beta_r = jnp.tile(beta_r, (d, 1))

    vmem_cap = _vmem_capacity()
    c_blk = _choose_c_block(b, g2, c2, hw, vmem_cap)

    kernel = functools.partial(_band_kernel, h=h, w=w)

    out = pl.pallas_call(
        kernel,
        out_shape=jax.ShapeDtypeStruct((b, g2, c2, hw), x.dtype),
        grid_spec=pltpu.PrefetchScalarGridSpec(
            num_scalar_prefetch=0,
            grid=(g2, c2 // c_blk),
            in_specs=[
                pl.BlockSpec((b, None, c_blk, hw), lambda j, k: (0, j, k, 0)),
                pl.BlockSpec((9, c_blk, 1), lambda j, k: (0, k, 0)),
                pl.BlockSpec((c_blk, 1), lambda j, k: (k, 0)),
                pl.BlockSpec((c_blk, 1), lambda j, k: (k, 0)),
                pl.BlockSpec((c_blk, 1), lambda j, k: (k, 0)),
            ],
            out_specs=pl.BlockSpec((b, None, c_blk, hw),
                                   lambda j, k: (0, j, k, 0)),
        ),
        compiler_params=pltpu.CompilerParams(
            dimension_semantics=("parallel", "parallel"),
            vmem_limit_bytes=min(int(vmem_cap * 3 // 4), 96 * 1024 * 1024)),
    )(x_flat, taps, bias_r, gamma_r, beta_r)

    return out.reshape(b, g, c, h, w)


def _reference(x, weight, bias, gamma, beta):
    # Pure-JAX reference of the PyTorch forward (training-mode BatchNorm,
    # exact erf GELU).
    b, g, c, h, w = x.shape
    xp = jnp.pad(x, ((0, 0), (0, 0), (0, 0), (1, 1), (1, 1)))
    z = jnp.zeros_like(x)
    for ky in range(3):
        for kx in range(3):
            z = z + (xp[:, :, :, ky:ky + h, kx:kx + w]
                     * weight[:, 0, ky, kx].reshape(1, 1, c, 1, 1))
    z = z + bias.reshape(1, 1, c, 1, 1)
    y = 0.5 * z * (1.0 + lax.erf(z * _INV_SQRT2))
    mean = jnp.mean(y, axis=(0, 3, 4), keepdims=True)
    var = jnp.mean((y - mean) ** 2, axis=(0, 3, 4), keepdims=True)
    yn = (y - mean) * lax.rsqrt(var + _BN_EPS)
    return yn * gamma.reshape(1, 1, c, 1, 1) + beta.reshape(1, 1, c, 1, 1)


if __name__ == "__main__":
    # Small deterministic example consistent with the module's forward:
    # x has shape (b, g, c, h, w).
    b, g, c, h, w = 2, 3, 4, 16, 16
    key = jax.random.PRNGKey(0)
    k_x, k_w, k_b = jax.random.split(key, 3)

    x = jax.random.normal(k_x, (b, g, c, h, w), dtype=jnp.float32)

    # Deterministic parameter init (shapes match nn.Conv2d(c, c, 3, groups=c)
    # and nn.BatchNorm2d(c) defaults: gamma=1, beta=0).
    fan_in = 1 * 3 * 3
    bound = 1.0 / (fan_in ** 0.5)
    weight = jax.random.uniform(k_w, (c, 1, 3, 3), jnp.float32, -bound, bound)
    bias = jax.random.uniform(k_b, (c,), jnp.float32, -bound, bound)
    gamma = jnp.ones((c,), jnp.float32)
    beta = jnp.zeros((c,), jnp.float32)

    out = jax.jit(band_wise_conv)(x, weight, bias, gamma, beta)
    out = jax.block_until_ready(out)
    assert out.shape == (b, g, c, h, w)

    ref = _reference(x, weight, bias, gamma, beta)
    assert bool(jnp.allclose(out, ref, atol=1e-4, rtol=1e-4)), (
        float(jnp.max(jnp.abs(out - ref))))
    print("KERNEL_OK")
</pallas_src>

<mosaic_0001>
module attributes {stable_mosaic.version = 11 : i64} {
  func.func @_band_kernel(%arg0: i32, %arg1: i32, %arg2: memref<2x1x4x256xf32, #tpu.memory_space<vmem>>, %arg3: memref<9x4x1xf32, #tpu.memory_space<vmem>>, %arg4: memref<4x1xf32, #tpu.memory_space<vmem>>, %arg5: memref<4x1xf32, #tpu.memory_space<vmem>>, %arg6: memref<4x1xf32, #tpu.memory_space<vmem>>, %arg7: memref<2x1x4x256xf32, #tpu.memory_space<vmem>>) attributes {dimension_semantics = [#tpu.dimension_semantics<parallel>, #tpu.dimension_semantics<parallel>], iteration_bounds = array<i64: 3, 1>, scalar_prefetch = 0 : i64, scratch_operands = 0 : i64, tpu.core_type = #tpu.core_type<tc>, window_params = [{transform_indices = @transform_0, window_bounds = array<i64: 2, 1, 4, 256>}, {transform_indices = @transform_1, window_bounds = array<i64: 9, 4, 1>}, {transform_indices = @transform_2, window_bounds = array<i64: 4, 1>}, {transform_indices = @transform_3, window_bounds = array<i64: 4, 1>}, {transform_indices = @transform_4, window_bounds = array<i64: 4, 1>}, {transform_indices = @transform_5, window_bounds = array<i64: 2, 1, 4, 256>}]} {
    %c0 = arith.constant 0 : index
    %c0_0 = arith.constant 0 : index
    %c0_1 = arith.constant 0 : index
    %c0_2 = arith.constant 0 : index
    %0 = vector.load %arg2[%c0, %c0_0, %c0_1, %c0_2] : memref<2x1x4x256xf32, #tpu.memory_space<vmem>>, vector<2x1x4x256xf32>
    %1 = vector.shape_cast %0 : vector<2x1x4x256xf32> to vector<2x4x256xf32>
    %2 = tpu.iota {dimensions = array<i32: 2>} : vector<1x1x256xi32>
    %c15_i32 = arith.constant 15 : i32
    %3 = vector.broadcast %c15_i32 : i32 to vector<1x1x256xi32>
    %4 = arith.andi %2, %3 : vector<1x1x256xi32>
    %c1_i32 = arith.constant 1 : i32
    %5 = vector.broadcast %c1_i32 : i32 to vector<1x1x256xi32>
    %6 = arith.cmpi sge, %4, %5 : vector<1x1x256xi32>
    %7 = arith.extui %6 : vector<1x1x256xi1> to vector<1x1x256xi32>
    %8 = arith.sitofp %7 : vector<1x1x256xi32> to vector<1x1x256xf32>
    %c14_i32 = arith.constant 14 : i32
    %9 = vector.broadcast %c14_i32 : i32 to vector<1x1x256xi32>
    %10 = arith.cmpi sle, %4, %9 : vector<1x1x256xi32>
    %11 = arith.extui %10 : vector<1x1x256xi1> to vector<1x1x256xi32>
    %12 = arith.sitofp %11 : vector<1x1x256xi32> to vector<1x1x256xf32>
    %c16_i32 = arith.constant 16 : i32
    %13 = vector.broadcast %c16_i32 : i32 to vector<1x1x256xi32>
    %14 = arith.cmpi sge, %2, %13 : vector<1x1x256xi32>
    %15 = arith.extui %14 : vector<1x1x256xi1> to vector<1x1x256xi32>
    %16 = arith.sitofp %15 : vector<1x1x256xi32> to vector<1x1x256xf32>
    %c240_i32 = arith.constant 240 : i32
    %17 = vector.broadcast %c240_i32 : i32 to vector<1x1x256xi32>
    %18 = arith.cmpi slt, %2, %17 : vector<1x1x256xi32>
    %19 = arith.extui %18 : vector<1x1x256xi1> to vector<1x1x256xi32>
    %20 = arith.sitofp %19 : vector<1x1x256xi32> to vector<1x1x256xf32>
    %21 = arith.mulf %16, %8 : vector<1x1x256xf32>
    %22 = arith.mulf %16, %12 : vector<1x1x256xf32>
    %23 = arith.mulf %20, %8 : vector<1x1x256xf32>
    %24 = arith.mulf %20, %12 : vector<1x1x256xf32>
    %c4 = arith.constant 4 : index
    %c0_3 = arith.constant 0 : index
    %c0_4 = arith.constant 0 : index
    %25 = vector.load %arg3[%c4, %c0_3, %c0_4] : memref<9x4x1xf32, #tpu.memory_space<vmem>>, vector<1x4x1xf32>
    %26 = vector.shape_cast %25 : vector<1x4x1xf32> to vector<4x1xf32>
    %27 = vector.shape_cast %26 : vector<4x1xf32> to vector<1x4x1xf32>
    %28 = vector.broadcast %27 : vector<1x4x1xf32> to vector<2x4x256xf32>
    %29 = arith.mulf %1, %28 : vector<2x4x256xf32>
    %c17_i32 = arith.constant 17 : i32
    %30 = tpu.dynamic_rotate %1 by %c17_i32 dim 2 : vector<2x4x256xf32>, i32 -> vector<2x4x256xf32>
    %c0_5 = arith.constant 0 : index
    %c0_6 = arith.constant 0 : index
    %c0_7 = arith.constant 0 : index
    %31 = vector.load %arg3[%c0_5, %c0_6, %c0_7] : memref<9x4x1xf32, #tpu.memory_space<vmem>>, vector<1x4x1xf32>
    %32 = vector.shape_cast %31 : vector<1x4x1xf32> to vector<4x1xf32>
    %33 = vector.shape_cast %32 : vector<4x1xf32> to vector<1x4x1xf32>
    %34 = vector.broadcast %21 : vector<1x1x256xf32> to vector<2x4x256xf32>
    %35 = arith.mulf %30, %34 : vector<2x4x256xf32>
    %36 = vector.broadcast %33 : vector<1x4x1xf32> to vector<2x4x256xf32>
    %37 = arith.mulf %35, %36 : vector<2x4x256xf32>
    %38 = arith.addf %29, %37 : vector<2x4x256xf32>
    %c16_i32_8 = arith.constant 16 : i32
    %39 = tpu.dynamic_rotate %1 by %c16_i32_8 dim 2 : vector<2x4x256xf32>, i32 -> vector<2x4x256xf32>
    %c1 = arith.constant 1 : index
    %c0_9 = arith.constant 0 : index
    %c0_10 = arith.constant 0 : index
    %40 = vector.load %arg3[%c1, %c0_9, %c0_10] : memref<9x4x1xf32, #tpu.memory_space<vmem>>, vector<1x4x1xf32>
    %41 = vector.shape_cast %40 : vector<1x4x1xf32> to vector<4x1xf32>
    %42 = vector.shape_cast %41 : vector<4x1xf32> to vector<1x4x1xf32>
    %43 = vector.broadcast %16 : vector<1x1x256xf32> to vector<2x4x256xf32>
    %44 = arith.mulf %39, %43 : vector<2x4x256xf32>
    %45 = vector.broadcast %42 : vector<1x4x1xf32> to vector<2x4x256xf32>
    %46 = arith.mulf %44, %45 : vector<2x4x256xf32>
    %47 = arith.addf %38, %46 : vector<2x4x256xf32>
    %c15_i32_11 = arith.constant 15 : i32
    %48 = tpu.dynamic_rotate %1 by %c15_i32_11 dim 2 : vector<2x4x256xf32>, i32 -> vector<2x4x256xf32>
    %c2 = arith.constant 2 : index
    %c0_12 = arith.constant 0 : index
    %c0_13 = arith.constant 0 : index
    %49 = vector.load %arg3[%c2, %c0_12, %c0_13] : memref<9x4x1xf32, #tpu.memory_space<vmem>>, vector<1x4x1xf32>
    %50 = vector.shape_cast %49 : vector<1x4x1xf32> to vector<4x1xf32>
    %51 = vector.shape_cast %50 : vector<4x1xf32> to vector<1x4x1xf32>
    %52 = vector.broadcast %22 : vector<1x1x256xf32> to vector<2x4x256xf32>
    %53 = arith.mulf %48, %52 : vector<2x4x256xf32>
    %54 = vector.broadcast %51 : vector<1x4x1xf32> to vector<2x4x256xf32>
    %55 = arith.mulf %53, %54 : vector<2x4x256xf32>
    %56 = arith.addf %47, %55 : vector<2x4x256xf32>
    %c1_i32_14 = arith.constant 1 : i32
    %57 = tpu.dynamic_rotate %1 by %c1_i32_14 dim 2 : vector<2x4x256xf32>, i32 -> vector<2x4x256xf32>
    %c3 = arith.constant 3 : index
    %c0_15 = arith.constant 0 : index
    %c0_16 = arith.constant 0 : index
    %58 = vector.load %arg3[%c3, %c0_15, %c0_16] : memref<9x4x1xf32, #tpu.memory_space<vmem>>, vector<1x4x1xf32>
    %59 = vector.shape_cast %58 : vector<1x4x1xf32> to vector<4x1xf32>
    %60 = vector.shape_cast %59 : vector<4x1xf32> to vector<1x4x1xf32>
    %61 = vector.broadcast %8 : vector<1x1x256xf32> to vector<2x4x256xf32>
    %62 = arith.mulf %57, %61 : vector<2x4x256xf32>
    %63 = vector.broadcast %60 : vector<1x4x1xf32> to vector<2x4x256xf32>
    %64 = arith.mulf %62, %63 : vector<2x4x256xf32>
    %65 = arith.addf %56, %64 : vector<2x4x256xf32>
    %c255_i32 = arith.constant 255 : i32
    %66 = tpu.dynamic_rotate %1 by %c255_i32 dim 2 : vector<2x4x256xf32>, i32 -> vector<2x4x256xf32>
    %c5 = arith.constant 5 : index
    %c0_17 = arith.constant 0 : index
    %c0_18 = arith.constant 0 : index
    %67 = vector.load %arg3[%c5, %c0_17, %c0_18] : memref<9x4x1xf32, #tpu.memory_space<vmem>>, vector<1x4x1xf32>
    %68 = vector.shape_cast %67 : vector<1x4x1xf32> to vector<4x1xf32>
    %69 = vector.shape_cast %68 : vector<4x1xf32> to vector<1x4x1xf32>
    %70 = vector.broadcast %12 : vector<1x1x256xf32> to vector<2x4x256xf32>
    %71 = arith.mulf %66, %70 : vector<2x4x256xf32>
    %72 = vector.broadcast %69 : vector<1x4x1xf32> to vector<2x4x256xf32>
    %73 = arith.mulf %71, %72 : vector<2x4x256xf32>
    %74 = arith.addf %65, %73 : vector<2x4x256xf32>
    %c241_i32 = arith.constant 241 : i32
    %75 = tpu.dynamic_rotate %1 by %c241_i32 dim 2 : vector<2x4x256xf32>, i32 -> vector<2x4x256xf32>
    %c6 = arith.constant 6 : index
    %c0_19 = arith.constant 0 : index
    %c0_20 = arith.constant 0 : index
    %76 = vector.load %arg3[%c6, %c0_19, %c0_20] : memref<9x4x1xf32, #tpu.memory_space<vmem>>, vector<1x4x1xf32>
    %77 = vector.shape_cast %76 : vector<1x4x1xf32> to vector<4x1xf32>
    %78 = vector.shape_cast %77 : vector<4x1xf32> to vector<1x4x1xf32>
    %79 = vector.broadcast %23 : vector<1x1x256xf32> to vector<2x4x256xf32>
    %80 = arith.mulf %75, %79 : vector<2x4x256xf32>
    %81 = vector.broadcast %78 : vector<1x4x1xf32> to vector<2x4x256xf32>
    %82 = arith.mulf %80, %81 : vector<2x4x256xf32>
    %83 = arith.addf %74, %82 : vector<2x4x256xf32>
    %c240_i32_21 = arith.constant 240 : i32
    %84 = tpu.dynamic_rotate %1 by %c240_i32_21 dim 2 : vector<2x4x256xf32>, i32 -> vector<2x4x256xf32>
    %c7 = arith.constant 7 : index
    %c0_22 = arith.constant 0 : index
    %c0_23 = arith.constant 0 : index
    %85 = vector.load %arg3[%c7, %c0_22, %c0_23] : memref<9x4x1xf32, #tpu.memory_space<vmem>>, vector<1x4x1xf32>
    %86 = vector.shape_cast %85 : vector<1x4x1xf32> to vector<4x1xf32>
    %87 = vector.shape_cast %86 : vector<4x1xf32> to vector<1x4x1xf32>
    %88 = vector.broadcast %20 : vector<1x1x256xf32> to vector<2x4x256xf32>
    %89 = arith.mulf %84, %88 : vector<2x4x256xf32>
    %90 = vector.broadcast %87 : vector<1x4x1xf32> to vector<2x4x256xf32>
    %91 = arith.mulf %89, %90 : vector<2x4x256xf32>
    %92 = arith.addf %83, %91 : vector<2x4x256xf32>
    %c239_i32 = arith.constant 239 : i32
    %93 = tpu.dynamic_rotate %1 by %c239_i32 dim 2 : vector<2x4x256xf32>, i32 -> vector<2x4x256xf32>
    %c8 = arith.constant 8 : index
    %c0_24 = arith.constant 0 : index
    %c0_25 = arith.constant 0 : index
    %94 = vector.load %arg3[%c8, %c0_24, %c0_25] : memref<9x4x1xf32, #tpu.memory_space<vmem>>, vector<1x4x1xf32>
    %95 = vector.shape_cast %94 : vector<1x4x1xf32> to vector<4x1xf32>
    %96 = vector.shape_cast %95 : vector<4x1xf32> to vector<1x4x1xf32>
    %97 = vector.broadcast %24 : vector<1x1x256xf32> to vector<2x4x256xf32>
    %98 = arith.mulf %93, %97 : vector<2x4x256xf32>
    %99 = vector.broadcast %96 : vector<1x4x1xf32> to vector<2x4x256xf32>
    %100 = arith.mulf %98, %99 : vector<2x4x256xf32>
    %101 = arith.addf %92, %100 : vector<2x4x256xf32>
    %c0_26 = arith.constant 0 : index
    %c0_27 = arith.constant 0 : index
    %102 = vector.load %arg4[%c0_26, %c0_27] : memref<4x1xf32, #tpu.memory_space<vmem>>, vector<4x1xf32>
    %103 = vector.shape_cast %102 : vector<4x1xf32> to vector<1x4x1xf32>
    %104 = vector.broadcast %103 : vector<1x4x1xf32> to vector<2x4x256xf32>
    %105 = arith.addf %101, %104 : vector<2x4x256xf32>
    %106 = math.absf %105 : vector<2x4x256xf32>
    %cst = arith.constant 0.707106769 : f32
    %107 = vector.broadcast %cst : f32 to vector<2x4x256xf32>
    %108 = arith.mulf %106, %107 : vector<2x4x256xf32>
    %cst_28 = arith.constant 0.327591091 : f32
    %109 = vector.broadcast %cst_28 : f32 to vector<2x4x256xf32>
    %110 = arith.mulf %109, %108 : vector<2x4x256xf32>
    %cst_29 = arith.constant 1.000000e+00 : f32
    %111 = vector.broadcast %cst_29 : f32 to vector<2x4x256xf32>
    %112 = arith.addf %111, %110 : vector<2x4x256xf32>
    %cst_30 = arith.constant 1.000000e+00 : f32
    %113 = vector.broadcast %cst_30 : f32 to vector<2x4x256xf32>
    %114 = arith.divf %113, %112 : vector<2x4x256xf32>
    %cst_31 = arith.constant 1.06140542 : f32
    %115 = vector.broadcast %cst_31 : f32 to vector<2x4x256xf32>
    %116 = arith.mulf %114, %115 : vector<2x4x256xf32>
    %cst_32 = arith.constant -1.45315206 : f32
    %117 = vector.broadcast %cst_32 : f32 to vector<2x4x256xf32>
    %118 = arith.addf %117, %116 : vector<2x4x256xf32>
    %119 = arith.mulf %114, %118 : vector<2x4x256xf32>
    %cst_33 = arith.constant 1.42141378 : f32
    %120 = vector.broadcast %cst_33 : f32 to vector<2x4x256xf32>
    %121 = arith.addf %120, %119 : vector<2x4x256xf32>
    %122 = arith.mulf %114, %121 : vector<2x4x256xf32>
    %cst_34 = arith.constant -0.284496725 : f32
    %123 = vector.broadcast %cst_34 : f32 to vector<2x4x256xf32>
    %124 = arith.addf %123, %122 : vector<2x4x256xf32>
    %125 = arith.mulf %114, %124 : vector<2x4x256xf32>
    %cst_35 = arith.constant 0.254829586 : f32
    %126 = vector.broadcast %cst_35 : f32 to vector<2x4x256xf32>
    %127 = arith.addf %126, %125 : vector<2x4x256xf32>
    %128 = arith.mulf %114, %127 : vector<2x4x256xf32>
    %129 = arith.mulf %108, %108 : vector<2x4x256xf32>
    %cst_36 = arith.constant 0.000000e+00 : f32
    %130 = vector.broadcast %cst_36 : f32 to vector<2x4x256xf32>
    %131 = arith.subf %130, %129 : vector<2x4x256xf32>
    %132 = math.exp %131 : vector<2x4x256xf32>
    %133 = arith.mulf %128, %132 : vector<2x4x256xf32>
    %cst_37 = arith.constant 1.000000e+00 : f32
    %134 = vector.broadcast %cst_37 : f32 to vector<2x4x256xf32>
    %135 = arith.subf %134, %133 : vector<2x4x256xf32>
    %136 = arith.mulf %106, %135 : vector<2x4x256xf32>
    %137 = arith.addf %105, %136 : vector<2x4x256xf32>
    %cst_38 = arith.constant 5.000000e-01 : f32
    %138 = vector.broadcast %cst_38 : f32 to vector<2x4x256xf32>
    %139 = arith.mulf %138, %137 : vector<2x4x256xf32>
    %cst_39 = arith.constant dense<0.000000e+00> : vector<4xf32>
    %140 = vector.multi_reduction <add>, %139, %cst_39 [0, 2] : vector<2x4x256xf32> to vector<4xf32>
    %141 = vector.shape_cast %140 : vector<4xf32> to vector<1x4x1xf32>
    %142 = arith.mulf %139, %139 : vector<2x4x256xf32>
    %cst_40 = arith.constant dense<0.000000e+00> : vector<4xf32>
    %143 = vector.multi_reduction <add>, %142, %cst_40 [0, 2] : vector<2x4x256xf32> to vector<4xf32>
    %144 = vector.shape_cast %143 : vector<4xf32> to vector<1x4x1xf32>
    %cst_41 = arith.constant 0.001953125 : f32
    %145 = vector.broadcast %cst_41 : f32 to vector<1x4x1xf32>
    %146 = arith.mulf %141, %145 : vector<1x4x1xf32>
    %cst_42 = arith.constant 0.001953125 : f32
    %147 = vector.broadcast %cst_42 : f32 to vector<1x4x1xf32>
    %148 = arith.mulf %144, %147 : vector<1x4x1xf32>
    %149 = arith.mulf %146, %146 : vector<1x4x1xf32>
    %150 = arith.subf %148, %149 : vector<1x4x1xf32>
    %cst_43 = arith.constant 0.000000e+00 : f32
    %151 = vector.broadcast %cst_43 : f32 to vector<1x4x1xf32>
    %152 = arith.maximumf %150, %151 : vector<1x4x1xf32>
    %c0_44 = arith.constant 0 : index
    %c0_45 = arith.constant 0 : index
    %153 = vector.load %arg5[%c0_44, %c0_45] : memref<4x1xf32, #tpu.memory_space<vmem>>, vector<4x1xf32>
    %154 = vector.shape_cast %153 : vector<4x1xf32> to vector<1x4x1xf32>
    %cst_46 = arith.constant 9.99999974E-6 : f32
    %155 = vector.broadcast %cst_46 : f32 to vector<1x4x1xf32>
    %156 = arith.addf %152, %155 : vector<1x4x1xf32>
    %157 = math.rsqrt %156 : vector<1x4x1xf32>
    %158 = arith.mulf %154, %157 : vector<1x4x1xf32>
    %c0_47 = arith.constant 0 : index
    %c0_48 = arith.constant 0 : index
    %159 = vector.load %arg6[%c0_47, %c0_48] : memref<4x1xf32, #tpu.memory_space<vmem>>, vector<4x1xf32>
    %160 = vector.shape_cast %159 : vector<4x1xf32> to vector<1x4x1xf32>
    %161 = arith.mulf %146, %158 : vector<1x4x1xf32>
    %162 = arith.subf %160, %161 : vector<1x4x1xf32>
    %163 = vector.broadcast %158 : vector<1x4x1xf32> to vector<2x4x256xf32>
    %164 = arith.mulf %139, %163 : vector<2x4x256xf32>
    %165 = vector.broadcast %162 : vector<1x4x1xf32> to vector<2x4x256xf32>
    %166 = arith.addf %164, %165 : vector<2x4x256xf32>
    %c0_49 = arith.constant 0 : index
    %c0_50 = arith.constant 0 : index
    %c0_51 = arith.constant 0 : index
    %c0_52 = arith.constant 0 : index
    %167 = vector.load %arg7[%c0_49, %c0_50, %c0_51, %c0_52] : memref<2x1x4x256xf32, #tpu.memory_space<vmem>>, vector<2x1x4x256xf32>
    %168 = vector.shape_cast %167 : vector<2x1x4x256xf32> to vector<2x4x256xf32>
    %169 = vector.shape_cast %166 : vector<2x4x256xf32> to vector<2x1x4x256xf32>
    tpu.vector_store %arg7[%c0_49, %c0_50, %c0_51, %c0_52], %169 {strides = array<i32>} : memref<2x1x4x256xf32, #tpu.memory_space<vmem>>, vector<2x1x4x256xf32>,
    return
  }
  func.func @transform_0(%arg0: i32, %arg1: i32) -> (i32, i32, i32, i32) {
    %c0_i32 = arith.constant 0 : i32
    %c0_i32_0 = arith.constant 0 : i32
    %c0_i32_1 = arith.constant 0 : i32
    return %c0_i32, %arg0, %arg1, %c0_i32_0 : i32, i32, i32, i32
  }
  func.func @transform_1(%arg0: i32, %arg1: i32) -> (i32, i32, i32) {
    %c0_i32 = arith.constant 0 : i32
    %c0_i32_0 = arith.constant 0 : i32
    %c0_i32_1 = arith.constant 0 : i32
    return %c0_i32, %arg1, %c0_i32_0 : i32, i32, i32
  }
  func.func @transform_2(%arg0: i32, %arg1: i32) -> (i32, i32) {
    %c0_i32 = arith.constant 0 : i32
    %c0_i32_0 = arith.constant 0 : i32
    return %arg1, %c0_i32 : i32, i32
  }
  func.func @transform_3(%arg0: i32, %arg1: i32) -> (i32, i32) {
    %c0_i32 = arith.constant 0 : i32
    %c0_i32_0 = arith.constant 0 : i32
    return %arg1, %c0_i32 : i32, i32
  }
  func.func @transform_4(%arg0: i32, %arg1: i32) -> (i32, i32) {
    %c0_i32 = arith.constant 0 : i32
    %c0_i32_0 = arith.constant 0 : i32
    return %arg1, %c0_i32 : i32, i32
  }
  func.func @transform_5(%arg0: i32, %arg1: i32) -> (i32, i32, i32, i32) {
    %c0_i32 = arith.constant 0 : i32
    %c0_i32_0 = arith.constant 0 : i32
    %c0_i32_1 = arith.constant 0 : i32
    return %c0_i32, %arg0, %arg1, %c0_i32_0 : i32, i32, i32, i32
  }
}

</mosaic_0001>

<llo_original>
// kernel: band_wise_conv.1
$region0: #{band_wise_conv.1}
  #allocation0 [shape = 'u32[]', space=smem, size = 0x4, offset = 0x4, fixed_abs, tag = 'smem constant byte address 0x4 - core index']
  #allocation1 [shape = 'u32[144,128]{1,0:T(1,128)}', space=vmem, size = 0x12000, scoped, tag = 'internal scratch']
  %s0 = inlined_call_operand.vmem [shape: f32[2,3,4,256], index: 0, kind: input, shape index: {}]
  %s1 = inlined_call_operand.vmem [shape: f32[9,4,1], index: 1, kind: input, shape index: {}]
  %s2 = inlined_call_operand.vmem [shape: f32[4,1], index: 2, kind: input, shape index: {}]
  %s3 = inlined_call_operand.vmem [shape: f32[4,1], index: 3, kind: input, shape index: {}]
  %s4 = inlined_call_operand.vmem [shape: f32[4,1], index: 4, kind: input, shape index: {}]
  %s5 = inlined_call_operand.vmem [shape: f32[2,3,4,256], index: 5, kind: output, shape index: {}]
  %s6 = sld [smem:[#allocation0]]
  $region125: #{band_wise_conv.1} parent=0
    _
  %s8 = ssub.s32 1, %s6
  %s9 = scalar_select 0, %s8, %s6
  $region1: #{band_wise_conv.1} parent=0
    #allocation2 [shape = 'u8[16384]{0}', space=vmem, size = 0x4000, scoped, tag = 'input window, operand 0']
    #allocation3 [shape = 'u8[16384]{0}', space=vmem, size = 0x4000, scoped, tag = 'output window, operand 0']
    loop: start=0, step=1, limit=5
    $region2: #{band_wise_conv.1} parent=1 // loop_pre_header
      _
    $region3: #{band_wise_conv.1} parent=1 // loop_header
      %s11 = sphi 0, %s15
      %p12 = scmp.ge.s32.totalorder %s11, 5
      %s18 = sphi 0, %s30
      %s19 = sphi 0, %s26
      %s20 = sphi 0, %s18
      %s21 = sphi 0, %s19
      %s22 = sphi 0, %s20
      %s23 = sphi 0, %s21
      %s35 = sphi 0, %s37
      %s38 = sphi 0, %s35
      %s39 = sphi 0, %s38
      %s55 = sphi 0, %s39
      %s61 = sphi 0, %s63
      %s64 = sphi 0, %s61
      %s65 = sphi 0, %s64
      %s81 = sphi 0, %s65
      %s87 = sphi 0, %s89
      %s90 = sphi 0, %s87
      %s91 = sphi 0, %s90
      %s107 = sphi 0, %s91
      %s113 = sphi 0, %s115
      %s116 = sphi 0, %s113
      %s117 = sphi 0, %s116
      %s133 = sphi 0, %s117
      %s139 = sphi 0, %s141
      %s142 = sphi 0, %s139
      %s143 = sphi 0, %s142
      %s159 = sphi 0, %s143
      %s167 = sphi 0, %s169
      %s170 = sphi 0, %s167
      %s171 = sphi 0, %s170
      %s187 = sphi 0, %s171
    $region4: #{band_wise_conv.1} parent=1 // loop_header_branch
      %14 = sbr.rel (%p12) target = $region8
    $region5: #{band_wise_conv.1} parent=1 // loop_body
      %s16 = ssub.s32 %s11, 1
      %s17 = ssub.s32 %s11, 2
      %s24 = sadd.s32 1, %s19
      %p25 = scmp.ge.s32.totalorder %s24, 1
      %s26 = scalar_select %p25, 0, %s24
      %s27 = sadd.s32 1, %s18
      %s28 = scalar_select %p25, %s27, %s18
      %p29 = scmp.ge.s32.totalorder %s28, 3
      %s30 = scalar_select %p29, 0, %s28
      %s31 = ssub.s32 %s18, %s30
      %s32 = ssub.s32 %s19, %s26
      %s33 = sor.u32 %s31, %s32
      %p34 = scmp.eq.s32.totalorder %s33, 0
      %s36 = sadd.s32 %s35, 1
      %s37 = scalar_select %p34, %s35, %s36
      %p40 = pneg %p34
      %p41 = scmp.eq.s32.totalorder %s11, 2
      %p42 = por %p40, %p41
      %p43 = scmp.ne.s32.totalorder %s35, %s38
      %p44 = scmp.eq.s32.totalorder %s11, 0
      %p45 = por %p43, %p44
      %p46 = scmp.ne.s32.totalorder %s35, %s38
      %p47 = scmp.eq.s32.totalorder %s16, 2
      %p48 = por %p46, %p47
      %p49 = scmp.ne.s32.totalorder %s38, %s39
      %p50 = scmp.eq.s32.totalorder %s16, 0
      %p51 = por %p49, %p50
      %p52 = scmp.ne.s32.totalorder %s38, %s39
      %p53 = scmp.eq.s32.totalorder %s17, 2
      %p54 = por %p52, %p53
      %p56 = scmp.ne.s32.totalorder %s39, %s55
      %p57 = scmp.eq.s32.totalorder %s17, 0
      %p58 = por %p56, %p57
      %s59 = ssub.s32 %s19, %s26
      %p60 = scmp.eq.s32.totalorder %s59, 0
      %s62 = sadd.s32 %s61, 1
      %s63 = scalar_select %p60, %s61, %s62
      %p66 = pneg %p60
      %p67 = scmp.eq.s32.totalorder %s11, 2
      %p68 = por %p66, %p67
      %p69 = scmp.ne.s32.totalorder %s61, %s64
      %p70 = scmp.eq.s32.totalorder %s11, 0
      %p71 = por %p69, %p70
      %p72 = scmp.ne.s32.totalorder %s61, %s64
      %p73 = scmp.eq.s32.totalorder %s16, 2
      %p74 = por %p72, %p73
      %p75 = scmp.ne.s32.totalorder %s64, %s65
      %p76 = scmp.eq.s32.totalorder %s16, 0
      %p77 = por %p75, %p76
      %p78 = scmp.ne.s32.totalorder %s64, %s65
      %p79 = scmp.eq.s32.totalorder %s17, 2
      %p80 = por %p78, %p79
      %p82 = scmp.ne.s32.totalorder %s65, %s81
      %p83 = scmp.eq.s32.totalorder %s17, 0
      %p84 = por %p82, %p83
      %s85 = ssub.s32 %s19, %s26
      %p86 = scmp.eq.s32.totalorder %s85, 0
      %s88 = sadd.s32 %s87, 1
      %s89 = scalar_select %p86, %s87, %s88
      %p92 = pneg %p86
      %p93 = scmp.eq.s32.totalorder %s11, 2
      %p94 = por %p92, %p93
      %p95 = scmp.ne.s32.totalorder %s87, %s90
      %p96 = scmp.eq.s32.totalorder %s11, 0
      %p97 = por %p95, %p96
      %p98 = scmp.ne.s32.totalorder %s87, %s90
      %p99 = scmp.eq.s32.totalorder %s16, 2
      %p100 = por %p98, %p99
      %p101 = scmp.ne.s32.totalorder %s90, %s91
      %p102 = scmp.eq.s32.totalorder %s16, 0
      %p103 = por %p101, %p102
      %p104 = scmp.ne.s32.totalorder %s90, %s91
      %p105 = scmp.eq.s32.totalorder %s17, 2
      %p106 = por %p104, %p105
      %p108 = scmp.ne.s32.totalorder %s91, %s107
      %p109 = scmp.eq.s32.totalorder %s17, 0
      %p110 = por %p108, %p109
      %s111 = ssub.s32 %s19, %s26
      %p112 = scmp.eq.s32.totalorder %s111, 0
      %s114 = sadd.s32 %s113, 1
      %s115 = scalar_select %p112, %s113, %s114
      %p118 = pneg %p112
      %p119 = scmp.eq.s32.totalorder %s11, 2
      %p120 = por %p118, %p119
      %p121 = scmp.ne.s32.totalorder %s113, %s116
      %p122 = scmp.eq.s32.totalorder %s11, 0
      %p123 = por %p121, %p122
      %p124 = scmp.ne.s32.totalorder %s113, %s116
      %p125 = scmp.eq.s32.totalorder %s16, 2
      %p126 = por %p124, %p125
      %p127 = scmp.ne.s32.totalorder %s116, %s117
      %p128 = scmp.eq.s32.totalorder %s16, 0
      %p129 = por %p127, %p128
      %p130 = scmp.ne.s32.totalorder %s116, %s117
      %p131 = scmp.eq.s32.totalorder %s17, 2
      %p132 = por %p130, %p131
      %p134 = scmp.ne.s32.totalorder %s117, %s133
      %p135 = scmp.eq.s32.totalorder %s17, 0
      %p136 = por %p134, %p135
      %s137 = ssub.s32 %s19, %s26
      %p138 = scmp.eq.s32.totalorder %s137, 0
      %s140 = sadd.s32 %s139, 1
      %s141 = scalar_select %p138, %s139, %s140
      %p144 = pneg %p138
      %p145 = scmp.eq.s32.totalorder %s11, 2
      %p146 = por %p144, %p145
      %p147 = scmp.ne.s32.totalorder %s139, %s142
      %p148 = scmp.eq.s32.totalorder %s11, 0
      %p149 = por %p147, %p148
      %p150 = scmp.ne.s32.totalorder %s139, %s142
      %p151 = scmp.eq.s32.totalorder %s16, 2
      %p152 = por %p150, %p151
      %p153 = scmp.ne.s32.totalorder %s142, %s143
      %p154 = scmp.eq.s32.totalorder %s16, 0
      %p155 = por %p153, %p154
      %p156 = scmp.ne.s32.totalorder %s142, %s143
      %p157 = scmp.eq.s32.totalorder %s17, 2
      %p158 = por %p156, %p157
      %p160 = scmp.ne.s32.totalorder %s143, %s159
      %p161 = scmp.eq.s32.totalorder %s17, 0
      %p162 = por %p160, %p161
      %s163 = ssub.s32 %s18, %s30
      %s164 = ssub.s32 %s19, %s26
      %s165 = sor.u32 %s163, %s164
      %p166 = scmp.eq.s32.totalorder %s165, 0
      %s168 = sadd.s32 %s167, 1
      %s169 = scalar_select %p166, %s167, %s168
      %p172 = pneg %p166
      %p173 = scmp.eq.s32.totalorder %s11, 2
      %p174 = por %p172, %p173
      %p175 = scmp.ne.s32.totalorder %s167, %s170
      %p176 = scmp.eq.s32.totalorder %s11, 0
      %p177 = por %p175, %p176
      %p178 = scmp.ne.s32.totalorder %s167, %s170
      %p179 = scmp.eq.s32.totalorder %s16, 2
      %p180 = por %p178, %p179
      %p181 = scmp.ne.s32.totalorder %s170, %s171
      %p182 = scmp.eq.s32.totalorder %s16, 0
      %p183 = por %p181, %p182
      %p184 = scmp.ne.s32.totalorder %s170, %s171
      %p185 = scmp.eq.s32.totalorder %s17, 2
      %p186 = por %p184, %p185
      %p188 = scmp.ne.s32.totalorder %s171, %s187
      %p189 = scmp.eq.s32.totalorder %s17, 0
      %p190 = por %p188, %p189
      %p191 = scmp.le.s32.totalorder 1, %s11
      %p192 = scmp.lt.s32.totalorder %s11, 4
      %p193 = pnand %p191, %p192
      %p194 = pneg %p193
      // Predicated region
      $region9: #{band_wise_conv.1} parent=5 // pred_check
        _
      $region10: #{band_wise_conv.1} parent=5 // pred_check_branch
        %196 = sbr.rel (%p193) target = $region12
      $region11: #{band_wise_conv.1} parent=5 // pred_region
        %s197 = ssub.s32 %s11, 1
        // Predicated region
        $region13: #{band_wise_conv.1} parent=11 // pred_check
          %p198 = pneg %p77
        $region14: #{band_wise_conv.1} parent=11 // pred_check_branch
          %200 = sbr.rel (%p198) target = $region16
        $region15: #{band_wise_conv.1} parent=11 // pred_region
          %p201 = scmp.lt.s32.totalorder %s21, 0
          %s202 = scalar_select %p201, %s21, 0
          %s203 = smul.addr %s202, 4
          %s204 = scalar_lea.vmem %s1, %s203
        $region16: #{band_wise_conv.1} parent=11 // pred_fallthru
          _
        // Predicated region
        $region17: #{band_wise_conv.1} parent=11 // pred_check
          %p205 = pneg %p103
        $region18: #{band_wise_conv.1} parent=11 // pred_check_branch
          %207 = sbr.rel (%p205) target = $region20
        $region19: #{band_wise_conv.1} parent=11 // pred_region
          %p208 = scmp.lt.s32.totalorder %s21, 0
          %s209 = scalar_select %p208, %s21, 0
          %s210 = smul.addr %s209, 4
          %s211 = scalar_lea.vmem %s2, %s210
        $region20: #{band_wise_conv.1} parent=11 // pred_fallthru
          _
        // Predicated region
        $region21: #{band_wise_conv.1} parent=11 // pred_check
          %p212 = pneg %p129
        $region22: #{band_wise_conv.1} parent=11 // pred_check_branch
          %214 = sbr.rel (%p212) target = $region24
        $region23: #{band_wise_conv.1} parent=11 // pred_region
          %p215 = scmp.lt.s32.totalorder %s21, 0
          %s216 = scalar_select %p215, %s21, 0
          %s217 = smul.addr %s216, 4
          %s218 = scalar_lea.vmem %s3, %s217
        $region24: #{band_wise_conv.1} parent=11 // pred_fallthru
          _
        // Predicated region
        $region25: #{band_wise_conv.1} parent=11 // pred_check
          %p219 = pneg %p155
        $region26: #{band_wise_conv.1} parent=11 // pred_check_branch
          %221 = sbr.rel (%p219) target = $region28
        $region27: #{band_wise_conv.1} parent=11 // pred_region
          %p222 = scmp.lt.s32.totalorder %s21, 0
          %s223 = scalar_select %p222, %s21, 0
          %s224 = smul.addr %s223, 4
          %s225 = scalar_lea.vmem %s4, %s224
        $region28: #{band_wise_conv.1} parent=11 // pred_fallthru
          _
      $region12: #{band_wise_conv.1} parent=5 // pred_fallthru
        _
      %p226 = scmp.lt.s32.totalorder %s11, 3
      // Predicated region
      $region29: #{band_wise_conv.1} parent=5 // pred_check
        %p227 = pneg %p226
      $region30: #{band_wise_conv.1} parent=5 // pred_check_branch
        %229 = sbr.rel (%p227) target = $region32
      $region31: #{band_wise_conv.1} parent=5 // pred_region
        // Predicated region
        $region33: #{band_wise_conv.1} parent=31 // pred_check
          %p230 = pneg %p45
        $region34: #{band_wise_conv.1} parent=31 // pred_check_branch
          %232 = sbr.rel (%p230) target = $region36
        $region35: #{band_wise_conv.1} parent=31 // pred_region
          %s233 = sand.u32 %s35, 1
          %s234 = sand.u32 %s35, 1
          %s235 = smul.addr %s234, 16
          %s236 = scalar_lea.vmem [#allocation2], %s235
          %s237 = smul.addr %s19, 2
          %s238 = smul.addr %s18, 2
          %s239 = sadd.s32 %s237, %s238
          %s240 = smul.addr %s239, 4
          %s241 = scalar_lea.vmem %s0, %s240
          // Predicated region
          $region37: #{band_wise_conv.1} parent=35 // pred_check
            _
          $region38: #{band_wise_conv.1} parent=35 // pred_check_branch
            %243 = sbr.rel (0) target = $region40
          $region39: #{band_wise_conv.1} parent=35 // pred_region
            // Predicated region
            $region41: #{band_wise_conv.1} parent=39 // pred_check
              _
            $region42: #{band_wise_conv.1} parent=39 // pred_check_branch
              %245 = sbr.rel (0) target = $region44
            $region43: #{band_wise_conv.1} parent=39 // pred_region
              // Predicated region
              $region56: #{band_wise_conv.1} parent=43 // pred_check
                _
              $region57: #{band_wise_conv.1} parent=43 // pred_check_branch
                %262 = sbr.rel (0) target = $region59
              $region58: #{band_wise_conv.1} parent=43 // pred_region
                loop: start=0, step=1, limit=1
                $region60: #{band_wise_conv.1} parent=58 // loop_pre_header
                  _
                $region61: #{band_wise_conv.1} parent=58 // loop_header
                  %s264 = sphi 0, %s268
                  %p265 = scmp.ge.s32.totalorder %s264, 1
                  %s269 = sphi %s241, %s241
                  %s270 = sphi %s236, %s236
                $region62: #{band_wise_conv.1} parent=58 // loop_header_branch
                  %267 = sbr.rel (%p265) target = $region66
                $region63: #{band_wise_conv.1} parent=58 // loop_body
                  %v271 = vld [vmem:[%s269] sm:$0xff]
                  %272 = vst [vmem:[%s270] sm:$0xff] %v271
                  %v273 = vld [vmem:[%s269 + $0x18] sm:$0xff]
                  %274 = vst [vmem:[%s270 + $0x8] sm:$0xff] %v273
                $region64: #{band_wise_conv.1} parent=58 // loop_footer
                  %s268 = sadd.s32 1, %s264
                $region65: #{band_wise_conv.1} parent=58 // loop_footer_branch
                  %263 = sbr.rel target = $region61
                $region66: #{band_wise_conv.1} parent=58 // loop_exit
                  _
              $region59: #{band_wise_conv.1} parent=43 // pred_fallthru
                _
              // Predicated region
              $region67: #{band_wise_conv.1} parent=43 // pred_check
                _
              $region68: #{band_wise_conv.1} parent=43 // pred_check_branch
                %276 = sbr.rel target = $region70
              $region69: #{band_wise_conv.1} parent=43 // pred_region
                _
              $region70: #{band_wise_conv.1} parent=43 // pred_fallthru
                _
            $region44: #{band_wise_conv.1} parent=39 // pred_fallthru
              _
            // Predicated region
            $region45: #{band_wise_conv.1} parent=39 // pred_check
              _
            $region46: #{band_wise_conv.1} parent=39 // pred_check_branch
              %247 = sbr.rel target = $region48
            $region47: #{band_wise_conv.1} parent=39 // pred_region
              loop: start=0, step=1, limit=1
              $region49: #{band_wise_conv.1} parent=47 // loop_pre_header
                _
              $region50: #{band_wise_conv.1} parent=47 // loop_header
                %s250 = sphi 0, %s254
                %p251 = scmp.ge.s32.totalorder %s250, 1
                %s255 = sphi %s241, %s241
                %s256 = sphi %s236, %s236
              $region51: #{band_wise_conv.1} parent=47 // loop_header_branch
                %253 = sbr.rel (%p251) target = $region55
              $region52: #{band_wise_conv.1} parent=47 // loop_body
                %v257 = vld [vmem:[%s255] sm:$0xff]
                %258 = vst [vmem:[%s256] sm:$0xff] %v257
                %v259 = vld [vmem:[%s255 + $0x18] sm:$0xff]
                %260 = vst [vmem:[%s256 + $0x8] sm:$0xff] %v259
              $region53: #{band_wise_conv.1} parent=47 // loop_footer
                %s254 = sadd.s32 1, %s250
              $region54: #{band_wise_conv.1} parent=47 // loop_footer_branch
                %249 = sbr.rel target = $region50
              $region55: #{band_wise_conv.1} parent=47 // loop_exit
                _
            $region48: #{band_wise_conv.1} parent=39 // pred_fallthru
              _
          $region40: #{band_wise_conv.1} parent=35 // pred_fallthru
            _
          %277 = vnop
        $region36: #{band_wise_conv.1} parent=31 // pred_fallthru
          _
      $region32: #{band_wise_conv.1} parent=5 // pred_fallthru
        _
      %p278 = scmp.le.s32.totalorder 1, %s11
      %p279 = scmp.lt.s32.totalorder %s11, 4
      %p280 = pnand %p278, %p279
      %p281 = pneg %p280
      // Predicated region
      $region71: #{band_wise_conv.1} parent=5 // pred_check
        _
      $region72: #{band_wise_conv.1} parent=5 // pred_check_branch
        %283 = sbr.rel (%p280) target = $region74
      $region73: #{band_wise_conv.1} parent=5 // pred_region
        %s284 = ssub.s32 %s11, 1
        %s285 = sand.u32 %s38, 1
        %s286 = sand.u32 %s38, 1
        %s287 = smul.addr %s286, 16
        %s288 = scalar_lea.vmem [#allocation2], %s287
        // Predicated region
        $region75: #{band_wise_conv.1} parent=73 // pred_check
          %p289 = pneg %p51
        $region76: #{band_wise_conv.1} parent=73 // pred_check_branch
          %291 = sbr.rel (%p289) target = $region78
        $region77: #{band_wise_conv.1} parent=73 // pred_region
          _
        $region78: #{band_wise_conv.1} parent=73 // pred_fallthru
          _
        %s292 = sand.u32 %s38, 1
        %s293 = sand.u32 %s38, 1
        %s294 = smul.addr %s293, 16
        %s295 = scalar_lea.vmem [#allocation2], %s294
        %p296 = pneg %p51
        %p297 = pneg %p48
        %p298 = scmp.lt.s32.totalorder %s21, 0
        %s299 = scalar_select %p298, %s21, 0
        %s300 = smul.addr %s299, 4
        %s301 = scalar_lea.vmem %s1, %s300
        %p302 = pneg %p77
        %p303 = pneg %p74
        %p304 = scmp.lt.s32.totalorder %s21, 0
        %s305 = scalar_select %p304, %s21, 0
        %s306 = smul.addr %s305, 4
        %s307 = scalar_lea.vmem %s2, %s306
        %p308 = pneg %p103
        %p309 = pneg %p100
        %p310 = scmp.lt.s32.totalorder %s21, 0
        %s311 = scalar_select %p310, %s21, 0
        %s312 = smul.addr %s311, 4
        %s313 = scalar_lea.vmem %s3, %s312
        %p314 = pneg %p129
        %p315 = pneg %p126
        %p316 = scmp.lt.s32.totalorder %s21, 0
        %s317 = scalar_select %p316, %s21, 0
        %s318 = smul.addr %s317, 4
        %s319 = scalar_lea.vmem %s4, %s318
        %p320 = pneg %p155
        %p321 = pneg %p152
        %p322 = pneg %p183
        %p323 = pneg %p180
        %s324 = sand.u32 %s170, 1
        %s325 = sand.u32 %s170, 1
        %s326 = smul.addr %s325, 16
        %s327 = scalar_lea.vmem [#allocation3], %s326
        %p328 = scmp.lt.s32.totalorder %s21, 0
        %s329 = scalar_select %p328, %s21, 0
        %s330 = smul.addr %s329, 4
        %s331 = scalar_lea.vmem %s1, %s330
        %p332 = scmp.lt.s32.totalorder %s21, 0
        %s333 = scalar_select %p332, %s21, 0
        %s334 = smul.addr %s333, 4
        %s335 = scalar_lea.vmem %s2, %s334
        %p336 = scmp.lt.s32.totalorder %s21, 0
        %s337 = scalar_select %p336, %s21, 0
        %s338 = smul.addr %s337, 4
        %s339 = scalar_lea.vmem %s3, %s338
        %p340 = scmp.lt.s32.totalorder %s21, 0
        %s341 = scalar_select %p340, %s21, 0
        %s342 = smul.addr %s341, 4
        %s343 = scalar_lea.vmem %s4, %s342
        %v344 = vld [vmem:[%s288] sm:$0xff]
        %v345 = vld [vmem:[%s288 + $0x8] sm:$0xff]
        %v346 = vlaneseq
        %v347 = vand.u32 %v346, 127
        %v348 = vadd.s32 %v347, 128
        %v349 = vand.u32 %v347, 15
        %v350 = vand.u32 %v348, 15
        %vm351 = vcmp.ge.s32.totalorder %v349, 1
        %vm352 = vcmp.ge.s32.totalorder %v350, 1
        %v353 = vsel %vm351, 1, 0
        %v354 = vsel %vm352, 1, 0
        %v355 = vcvt.s32.f32 %v353
        %v356 = vcvt.s32.f32 %v354
        %vm357 = vcmp.le.s32.totalorder %v349, 14
        %vm358 = vcmp.le.s32.totalorder %v350, 14
        %v359 = vsel %vm357, 1, 0
        %v360 = vsel %vm358, 1, 0
        %v361 = vcvt.s32.f32 %v359
        %v362 = vcvt.s32.f32 %v360
        %vm363 = vcmp.ge.s32.totalorder %v347, 16
        %vm364 = vcmp.ge.s32.totalorder %v348, 16
        %v365 = vsel %vm363, 1, 0
        %v366 = vsel %vm364, 1, 0
        %v367 = vcvt.s32.f32 %v365
        %v368 = vcvt.s32.f32 %v366
        %vm369 = vcmp.lt.s32.totalorder %v347, 240
        %vm370 = vcmp.lt.s32.totalorder %v348, 240
        %v371 = vsel %vm369, 1, 0
        %v372 = vsel %vm370, 1, 0
        %v373 = vcvt.s32.f32 %v371
        %v374 = vcvt.s32.f32 %v372
        %v375 = vmul.f32 %v367, %v355
        %v376 = vmul.f32 %v368, %v356
        %v377 = vmul.f32 %v367, %v361
        %v378 = vmul.f32 %v368, %v362
        %v379 = vmul.f32 %v373, %v355
        %v380 = vmul.f32 %v374, %v356
        %v381 = vmul.f32 %v373, %v361
        %v382 = vmul.f32 %v374, %v362
        %s383 = scalar_lea.vmem %s331, 16
        %v384 = vld [vmem:[%s383] sm:$0xf]
        %386 = vset.pattern.permute.xlu0 0
        %387 = vperm.xlu0 %386, %v384
        %v388 = vpop.permute.xlu0 %387
        %v390 = vunpack.c.l.s4 839922192
        %v391 = vunpack.c.0.s8 %v390
        %v392 = vlaneseq
        %v393 = vshrl.u32 %v392, 7
        %v394 = vsub.s32 %v391, %v393
        %v395 = vrot.slane %v388, %v394
        %v397 = vmul.f32 %v344, %v395
        %v398 = vmul.f32 %v345, %v395
        %v401 = vcombine.high %v344, %v344
        %v402 = vcombine.high %v345, %v345
        %405 = vrot.lane.b32.xlu0 %v344, 17
        %v406 = vpop.permute.xlu0 %405
        %407 = vrot.lane.b32.xlu0 %v345, 17
        %v408 = vpop.permute.xlu0 %407
        %409 = vrot.lane.b32.xlu0 %v401, 17
        %v410 = vpop.permute.xlu0 %409
        %411 = vrot.lane.b32.xlu0 %v402, 17
        %v412 = vpop.permute.xlu0 %411
        %vm413 = vcmp.lt.s32.totalorder %v347, 17
        %v414 = vsel %vm413, %v406, %v410
        %v415 = vsel %vm413, %v408, %v412
        %v416 = vsel %vm413, %v410, %v406
        %v417 = vsel %vm413, %v412, %v408
        %v418 = vld [vmem:[%s331] sm:$0xf]
        %v419 = vmul.f32 %v416, %v375
        %v420 = vmul.f32 %v414, %v376
        %v421 = vmul.f32 %v417, %v375
        %v422 = vmul.f32 %v415, %v376
        %424 = vset.pattern.permute.xlu0 0
        %425 = vperm.xlu0 %424, %v418
        %v426 = vpop.permute.xlu0 %425
        %v428 = vmul.f32 %v419, %v426
        %v429 = vmul.f32 %v420, %v426
        %v430 = vmul.f32 %v421, %v426
        %v431 = vmul.f32 %v422, %v426
        %v436 = vcombine.low %v428, %v429
        %v437 = vcombine.low %v430, %v431
        %v440 = vadd.f32 %v397, %v436
        %v441 = vadd.f32 %v398, %v437
        %442 = vrot.lane.b32.xlu0 %v344, 16
        %v443 = vpop.permute.xlu0 %442
        %444 = vrot.lane.b32.xlu0 %v345, 16
        %v445 = vpop.permute.xlu0 %444
        %446 = vrot.lane.b32.xlu0 %v401, 16
        %v447 = vpop.permute.xlu0 %446
        %448 = vrot.lane.b32.xlu0 %v402, 16
        %v449 = vpop.permute.xlu0 %448
        %vm450 = vcmp.lt.s32.totalorder %v347, 16
        %v451 = vsel %vm450, %v443, %v447
        %v452 = vsel %vm450, %v445, %v449
        %v453 = vsel %vm450, %v447, %v443
        %v454 = vsel %vm450, %v449, %v445
        %s455 = scalar_lea.vmem %s331, 4
        %v456 = vld [vmem:[%s455] sm:$0xf]
        %v457 = vmul.f32 %v453, %v367
        %v458 = vmul.f32 %v451, %v368
        %v459 = vmul.f32 %v454, %v367
        %v460 = vmul.f32 %v452, %v368
        %462 = vset.pattern.permute.xlu0 0
        %463 = vperm.xlu0 %462, %v456
        %v464 = vpop.permute.xlu0 %463
        %v466 = vmul.f32 %v457, %v464
        %v467 = vmul.f32 %v458, %v464
        %v468 = vmul.f32 %v459, %v464
        %v469 = vmul.f32 %v460, %v464
        %v474 = vcombine.low %v466, %v467
        %v475 = vcombine.low %v468, %v469
        %v478 = vadd.f32 %v440, %v474
        %v479 = vadd.f32 %v441, %v475
        %480 = vrot.lane.b32.xlu0 %v344, 15
        %v481 = vpop.permute.xlu0 %480
        %482 = vrot.lane.b32.xlu0 %v345, 15
        %v483 = vpop.permute.xlu0 %482
        %484 = vrot.lane.b32.xlu0 %v401, 15
        %v485 = vpop.permute.xlu0 %484
        %486 = vrot.lane.b32.xlu0 %v402, 15
        %v487 = vpop.permute.xlu0 %486
        %vm488 = vcmp.lt.s32.totalorder %v347, 15
        %v489 = vsel %vm488, %v481, %v485
        %v490 = vsel %vm488, %v483, %v487
        %v491 = vsel %vm488, %v485, %v481
        %v492 = vsel %vm488, %v487, %v483
        %s493 = scalar_lea.vmem %s331, 8
        %v494 = vld [vmem:[%s493] sm:$0xf]
        %v495 = vmul.f32 %v491, %v377
        %v496 = vmul.f32 %v489, %v378
        %v497 = vmul.f32 %v492, %v377
        %v498 = vmul.f32 %v490, %v378
        %500 = vset.pattern.permute.xlu0 0
        %501 = vperm.xlu0 %500, %v494
        %v502 = vpop.permute.xlu0 %501
        %v504 = vmul.f32 %v495, %v502
        %v505 = vmul.f32 %v496, %v502
        %v506 = vmul.f32 %v497, %v502
        %v507 = vmul.f32 %v498, %v502
        %v512 = vcombine.low %v504, %v505
        %v513 = vcombine.low %v506, %v507
        %v516 = vadd.f32 %v478, %v512
        %v517 = vadd.f32 %v479, %v513
        %518 = vrot.lane.b32.xlu0 %v344, 1
        %v519 = vpop.permute.xlu0 %518
        %520 = vrot.lane.b32.xlu0 %v345, 1
        %v521 = vpop.permute.xlu0 %520
        %522 = vrot.lane.b32.xlu0 %v401, 1
        %v523 = vpop.permute.xlu0 %522
        %524 = vrot.lane.b32.xlu0 %v402, 1
        %v525 = vpop.permute.xlu0 %524
        %vm526 = vcmp.lt.s32.totalorder %v347, 1
        %v527 = vsel %vm526, %v519, %v523
        %v528 = vsel %vm526, %v521, %v525
        %v529 = vsel %vm526, %v523, %v519
        %v530 = vsel %vm526, %v525, %v521
        %s531 = scalar_lea.vmem %s331, 12
        %v532 = vld [vmem:[%s531] sm:$0xf]
        %v533 = vmul.f32 %v529, %v355
        %v534 = vmul.f32 %v527, %v356
        %v535 = vmul.f32 %v530, %v355
        %v536 = vmul.f32 %v528, %v356
        %538 = vset.pattern.permute.xlu0 0
        %539 = vperm.xlu0 %538, %v532
        %v540 = vpop.permute.xlu0 %539
        %v542 = vmul.f32 %v533, %v540
        %v543 = vmul.f32 %v534, %v540
        %v544 = vmul.f32 %v535, %v540
        %v545 = vmul.f32 %v536, %v540
        %v550 = vcombine.low %v542, %v543
        %v551 = vcombine.low %v544, %v545
        %v554 = vadd.f32 %v516, %v550
        %v555 = vadd.f32 %v517, %v551
        %556 = vrot.lane.b32.xlu0 %v344, 127
        %v557 = vpop.permute.xlu0 %556
        %558 = vrot.lane.b32.xlu0 %v345, 127
        %v559 = vpop.permute.xlu0 %558
        %560 = vrot.lane.b32.xlu0 %v401, 127
        %v561 = vpop.permute.xlu0 %560
        %562 = vrot.lane.b32.xlu0 %v402, 127
        %v563 = vpop.permute.xlu0 %562
        %vm564 = vcmp.lt.s32.totalorder %v347, 127
        %v565 = vsel %vm564, %v557, %v561
        %v566 = vsel %vm564, %v559, %v563
        %v567 = vsel %vm564, %v561, %v557
        %v568 = vsel %vm564, %v563, %v559
        %s569 = scalar_lea.vmem %s331, 20
        %v570 = vld [vmem:[%s569] sm:$0xf]
        %v571 = vmul.f32 %v565, %v361
        %v572 = vmul.f32 %v567, %v362
        %v573 = vmul.f32 %v566, %v361
        %v574 = vmul.f32 %v568, %v362
        %576 = vset.pattern.permute.xlu0 0
        %577 = vperm.xlu0 %576, %v570
        %v578 = vpop.permute.xlu0 %577
        %v580 = vmul.f32 %v571, %v578
        %v581 = vmul.f32 %v572, %v578
        %v582 = vmul.f32 %v573, %v578
        %v583 = vmul.f32 %v574, %v578
        %v588 = vcombine.low %v580, %v581
        %v589 = vcombine.low %v582, %v583
        %v592 = vadd.f32 %v554, %v588
        %v593 = vadd.f32 %v555, %v589
        %594 = vrot.lane.b32.xlu0 %v344, 113
        %v595 = vpop.permute.xlu0 %594
        %596 = vrot.lane.b32.xlu0 %v345, 113
        %v597 = vpop.permute.xlu0 %596
        %598 = vrot.lane.b32.xlu0 %v401, 113
        %v599 = vpop.permute.xlu0 %598
        %600 = vrot.lane.b32.xlu0 %v402, 113
        %v601 = vpop.permute.xlu0 %600
        %vm602 = vcmp.lt.s32.totalorder %v347, 113
        %v603 = vsel %vm602, %v595, %v599
        %v604 = vsel %vm602, %v597, %v601
        %v605 = vsel %vm602, %v599, %v595
        %v606 = vsel %vm602, %v601, %v597
        %s607 = scalar_lea.vmem %s331, 24
        %v608 = vld [vmem:[%s607] sm:$0xf]
        %v609 = vmul.f32 %v603, %v379
        %v610 = vmul.f32 %v605, %v380
        %v611 = vmul.f32 %v604, %v379
        %v612 = vmul.f32 %v606, %v380
        %614 = vset.pattern.permute.xlu0 0
        %615 = vperm.xlu0 %614, %v608
        %v616 = vpop.permute.xlu0 %615
        %v618 = vmul.f32 %v609, %v616
        %v619 = vmul.f32 %v610, %v616
        %v620 = vmul.f32 %v611, %v616
        %v621 = vmul.f32 %v612, %v616
        %v626 = vcombine.low %v618, %v619
        %v627 = vcombine.low %v620, %v621
        %v630 = vadd.f32 %v592, %v626
        %v631 = vadd.f32 %v593, %v627
        %632 = vrot.lane.b32.xlu0 %v344, 112
        %v633 = vpop.permute.xlu0 %632
        %634 = vrot.lane.b32.xlu0 %v345, 112
        %v635 = vpop.permute.xlu0 %634
        %636 = vrot.lane.b32.xlu0 %v401, 112
        %v637 = vpop.permute.xlu0 %636
        %638 = vrot.lane.b32.xlu0 %v402, 112
        %v639 = vpop.permute.xlu0 %638
        %vm640 = vcmp.lt.s32.totalorder %v347, 112
        %v641 = vsel %vm640, %v633, %v637
        %v642 = vsel %vm640, %v635, %v639
        %v643 = vsel %vm640, %v637, %v633
        %v644 = vsel %vm640, %v639, %v635
        %s645 = scalar_lea.vmem %s331, 28
        %v646 = vld [vmem:[%s645] sm:$0xf]
        %v647 = vmul.f32 %v641, %v373
        %v648 = vmul.f32 %v643, %v374
        %v649 = vmul.f32 %v642, %v373
        %v650 = vmul.f32 %v644, %v374
        %652 = vset.pattern.permute.xlu0 0
        %653 = vperm.xlu0 %652, %v646
        %v654 = vpop.permute.xlu0 %653
        %v656 = vmul.f32 %v647, %v654
        %v657 = vmul.f32 %v648, %v654
        %v658 = vmul.f32 %v649, %v654
        %v659 = vmul.f32 %v650, %v654
        %v664 = vcombine.low %v656, %v657
        %v665 = vcombine.low %v658, %v659
        %v668 = vadd.f32 %v630, %v664
        %v669 = vadd.f32 %v631, %v665
        %670 = vrot.lane.b32.xlu0 %v344, 111
        %v671 = vpop.permute.xlu0 %670
        %672 = vrot.lane.b32.xlu0 %v345, 111
        %v673 = vpop.permute.xlu0 %672
        %674 = vrot.lane.b32.xlu0 %v401, 111
        %v675 = vpop.permute.xlu0 %674
        %676 = vrot.lane.b32.xlu0 %v402, 111
        %v677 = vpop.permute.xlu0 %676
        %vm678 = vcmp.lt.s32.totalorder %v347, 111
        %v679 = vsel %vm678, %v671, %v675
        %v680 = vsel %vm678, %v673, %v677
        %v681 = vsel %vm678, %v675, %v671
        %v682 = vsel %vm678, %v677, %v673
        %s683 = scalar_lea.vmem %s331, 32
        %v684 = vld [vmem:[%s683] sm:$0xf]
        %v685 = vmul.f32 %v679, %v381
        %v686 = vmul.f32 %v681, %v382
        %v687 = vmul.f32 %v680, %v381
        %v688 = vmul.f32 %v682, %v382
        %690 = vset.pattern.permute.xlu0 0
        %691 = vperm.xlu0 %690, %v684
        %v692 = vpop.permute.xlu0 %691
        %v694 = vmul.f32 %v685, %v692
        %v695 = vmul.f32 %v686, %v692
        %v696 = vmul.f32 %v687, %v692
        %v697 = vmul.f32 %v688, %v692
        %v702 = vcombine.low %v694, %v695
        %v703 = vcombine.low %v696, %v697
        %v706 = vadd.f32 %v668, %v702
        %v707 = vadd.f32 %v669, %v703
        %v708 = vld [vmem:[%s335] sm:$0xf]
        %710 = vset.pattern.permute.xlu0 0
        %711 = vperm.xlu0 %710, %v708
        %v712 = vpop.permute.xlu0 %711
        %v714 = vunpack.c.l.s4 839922192
        %v715 = vunpack.c.0.s8 %v714
        %v716 = vlaneseq
        %v717 = vshrl.u32 %v716, 7
        %v718 = vsub.s32 %v715, %v717
        %v719 = vrot.slane %v712, %v718
        %v721 = vadd.f32 %v706, %v719
        %v722 = vadd.f32 %v707, %v719
        %v723 = vand.u32 2147483647, %v721
        %v724 = vand.u32 2147483647, %v722
        %v725 = vmul.f32 %v723, 0.70710677
        %v726 = vmul.f32 %v724, 0.70710677
        %v727 = vmul.f32 %v725, 0.3275911
        %v728 = vmul.f32 %v726, 0.3275911
        %v729 = vadd.f32 %v727, 1.0
        %v730 = vadd.f32 %v728, 1.0
        %v731 = vrcp.pop %v729
        %v732 = vmul.f32 1.0, %v731
        %v733 = vrcp.pop %v730
        %v734 = vmul.f32 1.0, %v733
        %v735 = vmul.f32 %v732, 1.0614054
        %v736 = vmul.f32 %v734, 1.0614054
        %v737 = vadd.f32 %v735, -1.4531521
        %v738 = vadd.f32 %v736, -1.4531521
        %v739 = vmul.f32 %v732, %v737
        %v740 = vmul.f32 %v734, %v738
        %v741 = vadd.f32 %v739, 1.4214138
        %v742 = vadd.f32 %v740, 1.4214138
        %v743 = vmul.f32 %v732, %v741
        %v744 = vmul.f32 %v734, %v742
        %v745 = vadd.f32 %v743, -0.28449672
        %v746 = vadd.f32 %v744, -0.28449672
        %v747 = vmul.f32 %v732, %v745
        %v748 = vmul.f32 %v734, %v746
        %v749 = vadd.f32 %v747, 0.2548296
        %v750 = vadd.f32 %v748, 0.2548296
        %v751 = vmul.f32 %v732, %v749
        %v752 = vmul.f32 %v734, %v750
        %v753 = vmul.f32 %v725, %v725
        %v754 = vmul.f32 %v726, %v726
        %v755 = vsub.f32 0.0, %v753
        %v756 = vsub.f32 0.0, %v754
        %v757 = vmul.f32 %v755, 1.442695
        %v758 = vpow.pop %v757
        %v759 = vmul.f32 %v756, 1.442695
        %v760 = vpow.pop %v759
        %v761 = vmul.f32 %v751, %v758
        %v762 = vmul.f32 %v752, %v760
        %v763 = vsub.f32 1.0, %v761
        %v764 = vsub.f32 1.0, %v762
        %v765 = vmul.f32 %v723, %v763
        %v766 = vmul.f32 %v724, %v764
        %v767 = vadd.f32 %v721, %v765
        %v768 = vadd.f32 %v722, %v766
        %v769 = vmul.f32 %v767, 0.5
        %v770 = vmul.f32 %v768, 0.5
        %v773 = vcombine.high %v769, %v769
        %v774 = vcombine.high %v770, %v770
        %vm777 = vcmask 1043456
        %v778 = vsel %vm777, %v769, 0.0
        %v779 = vsel %vm777, %v773, 0.0
        %v780 = vadd.f32 %v778, %v779
        %v781 = vsel %vm777, %v770, 0.0
        %v782 = vadd.f32 %v780, %v781
        %v783 = vsel %vm777, %v774, 0.0
        %v784 = vadd.f32 %v782, %v783
        %785 = vadd.xlane.f32.xlu0 %v784
        %v786 = vpop.xlane.xlu0 %785
        %v787 = vmul.f32 %v769, %v769
        %v788 = vmul.f32 %v770, %v770
        %v791 = vcombine.high %v787, %v787
        %v792 = vcombine.high %v788, %v788
        %v795 = vsel %vm777, %v787, 0.0
        %v796 = vsel %vm777, %v791, 0.0
        %v797 = vadd.f32 %v795, %v796
        %v798 = vsel %vm777, %v788, 0.0
        %v799 = vadd.f32 %v797, %v798
        %v800 = vsel %vm777, %v792, 0.0
        %v801 = vadd.f32 %v799, %v800
        %802 = vadd.xlane.f32.xlu0 %v801
        %v803 = vpop.xlane.xlu0 %802
        %v804 = vmul.f32 %v786, 0.001953125
        %v805 = vmul.f32 %v803, 0.001953125
        %v806 = vmul.f32 %v804, %v804
        %v807 = vsub.f32 %v805, %v806
        %v808 = vmax.f32 %v807, 0.0
        %v809 = vld [vmem:[%s339] sm:$0xf]
        %v810 = vadd.f32 %v808, 1e-05
        %v811 = vrsqrt.pop %v810
        %v812 = vmul.f32 %v809, %v811
        %v813 = vld [vmem:[%s343] sm:$0xf]
        %v814 = vmul.f32 %v804, %v812
        %v815 = vsub.f32 %v813, %v814
        %817 = vset.pattern.permute.xlu0 0
        %818 = vperm.xlu0 %817, %v812
        %v819 = vpop.permute.xlu0 %818
        %v821 = vunpack.c.l.s4 839922192
        %v822 = vunpack.c.0.s8 %v821
        %v823 = vlaneseq
        %v824 = vshrl.u32 %v823, 7
        %v825 = vsub.s32 %v822, %v824
        %v826 = vrot.slane %v819, %v825
        %v828 = vmul.f32 %v769, %v826
        %v829 = vmul.f32 %v770, %v826
        %831 = vset.pattern.permute.xlu0 0
        %832 = vperm.xlu0 %831, %v815
        %v833 = vpop.permute.xlu0 %832
        %v835 = vunpack.c.l.s4 839922192
        %v836 = vunpack.c.0.s8 %v835
        %v837 = vlaneseq
        %v838 = vshrl.u32 %v837, 7
        %v839 = vsub.s32 %v836, %v838
        %v840 = vrot.slane %v833, %v839
        %v842 = vadd.f32 %v828, %v840
        %v843 = vadd.f32 %v829, %v840
        %844 = vst [vmem:[%s327] sm:$0xff] %v842
        %845 = vst [vmem:[%s327 + $0x8] sm:$0xff] %v843
        %s846 = sand.u32 %s170, 1
        %s847 = sand.u32 %s170, 1
        %s848 = smul.addr %s847, 16
        %s849 = scalar_lea.vmem [#allocation3], %s848
        // Predicated region
        $region79: #{band_wise_conv.1} parent=73 // pred_check
          %p850 = pneg %p180
        $region80: #{band_wise_conv.1} parent=73 // pred_check_branch
          %852 = sbr.rel (%p850) target = $region82
        $region81: #{band_wise_conv.1} parent=73 // pred_region
          %s853 = smul.addr %s21, 2
          %s854 = smul.addr %s20, 2
          %s855 = sadd.s32 %s853, %s854
          %s856 = smul.addr %s855, 4
          %s857 = scalar_lea.vmem %s5, %s856
          // Predicated region
          $region83: #{band_wise_conv.1} parent=81 // pred_check
            _
          $region84: #{band_wise_conv.1} parent=81 // pred_check_branch
            %859 = sbr.rel (0) target = $region86
          $region85: #{band_wise_conv.1} parent=81 // pred_region
            // Predicated region
            $region87: #{band_wise_conv.1} parent=85 // pred_check
              _
            $region88: #{band_wise_conv.1} parent=85 // pred_check_branch
              %861 = sbr.rel (0) target = $region90
            $region89: #{band_wise_conv.1} parent=85 // pred_region
              // Predicated region
              $region102: #{band_wise_conv.1} parent=89 // pred_check
                _
              $region103: #{band_wise_conv.1} parent=89 // pred_check_branch
                %878 = sbr.rel (0) target = $region105
              $region104: #{band_wise_conv.1} parent=89 // pred_region
                loop: start=0, step=1, limit=1
                $region106: #{band_wise_conv.1} parent=104 // loop_pre_header
                  _
                $region107: #{band_wise_conv.1} parent=104 // loop_header
                  %s880 = sphi 0, %s884
                  %p881 = scmp.ge.s32.totalorder %s880, 1
                  %s885 = sphi %s849, %s849
                  %s886 = sphi %s857, %s857
                $region108: #{band_wise_conv.1} parent=104 // loop_header_branch
                  %883 = sbr.rel (%p881) target = $region112
                $region109: #{band_wise_conv.1} parent=104 // loop_body
                  %v887 = vld [vmem:[%s885] sm:$0xff]
                  %888 = vst [vmem:[%s886] sm:$0xff] %v887
                  %v889 = vld [vmem:[%s885 + $0x8] sm:$0xff]
                  %890 = vst [vmem:[%s886 + $0x18] sm:$0xff] %v889
                $region110: #{band_wise_conv.1} parent=104 // loop_footer
                  %s884 = sadd.s32 1, %s880
                $region111: #{band_wise_conv.1} parent=104 // loop_footer_branch
                  %879 = sbr.rel target = $region107
                $region112: #{band_wise_conv.1} parent=104 // loop_exit
                  _
              $region105: #{band_wise_conv.1} parent=89 // pred_fallthru
                _
              // Predicated region
              $region113: #{band_wise_conv.1} parent=89 // pred_check
                _
              $region114: #{band_wise_conv.1} parent=89 // pred_check_branch
                %892 = sbr.rel target = $region116
              $region115: #{band_wise_conv.1} parent=89 // pred_region
                _
              $region116: #{band_wise_conv.1} parent=89 // pred_fallthru
                _
            $region90: #{band_wise_conv.1} parent=85 // pred_fallthru
              _
            // Predicated region
            $region91: #{band_wise_conv.1} parent=85 // pred_check
              _
            $region92: #{band_wise_conv.1} parent=85 // pred_check_branch
              %863 = sbr.rel target = $region94
            $region93: #{band_wise_conv.1} parent=85 // pred_region
              loop: start=0, step=1, limit=1
              $region95: #{band_wise_conv.1} parent=93 // loop_pre_header
                _
              $region96: #{band_wise_conv.1} parent=93 // loop_header
                %s866 = sphi 0, %s870
                %p867 = scmp.ge.s32.totalorder %s866, 1
                %s871 = sphi %s849, %s849
                %s872 = sphi %s857, %s857
              $region97: #{band_wise_conv.1} parent=93 // loop_header_branch
                %869 = sbr.rel (%p867) target = $region101
              $region98: #{band_wise_conv.1} parent=93 // loop_body
                %v873 = vld [vmem:[%s871] sm:$0xff]
                %874 = vst [vmem:[%s872] sm:$0xff] %v873
                %v875 = vld [vmem:[%s871 + $0x8] sm:$0xff]
                %876 = vst [vmem:[%s872 + $0x18] sm:$0xff] %v875
              $region99: #{band_wise_conv.1} parent=93 // loop_footer
                %s870 = sadd.s32 1, %s866
              $region100: #{band_wise_conv.1} parent=93 // loop_footer_branch
                %865 = sbr.rel target = $region96
              $region101: #{band_wise_conv.1} parent=93 // loop_exit
                _
            $region94: #{band_wise_conv.1} parent=85 // pred_fallthru
              _
          $region86: #{band_wise_conv.1} parent=81 // pred_fallthru
            _
          %893 = vnop
        $region82: #{band_wise_conv.1} parent=73 // pred_fallthru
          _
      $region74: #{band_wise_conv.1} parent=5 // pred_fallthru
        _
      %p894 = scmp.le.s32.totalorder 2, %s11
      // Predicated region
      $region117: #{band_wise_conv.1} parent=5 // pred_check
        %p895 = pneg %p894
      $region118: #{band_wise_conv.1} parent=5 // pred_check_branch
        %897 = sbr.rel (%p895) target = $region120
      $region119: #{band_wise_conv.1} parent=5 // pred_region
        %s898 = ssub.s32 %s11, 2
        // Predicated region
        $region121: #{band_wise_conv.1} parent=119 // pred_check
          %p899 = pneg %p186
        $region122: #{band_wise_conv.1} parent=119 // pred_check_branch
          %901 = sbr.rel (%p899) target = $region124
        $region123: #{band_wise_conv.1} parent=119 // pred_region
          %s902 = sand.u32 %s171, 1
          %s903 = sand.u32 %s171, 1
          %s904 = smul.addr %s903, 16
          %s905 = scalar_lea.vmem [#allocation3], %s904
        $region124: #{band_wise_conv.1} parent=119 // pred_fallthru
          _
      $region120: #{band_wise_conv.1} parent=5 // pred_fallthru
        _
    $region6: #{band_wise_conv.1} parent=1 // loop_footer
      %s15 = sadd.s32 1, %s11
    $region7: #{band_wise_conv.1} parent=1 // loop_footer_branch
      %10 = sbr.rel target = $region3
    $region8: #{band_wise_conv.1} parent=1 // loop_exit
      _

</llo_original>
